<compile_context>
chip_gen: v7x
topology: tpu7x:2x2x1
jax: 0.10.0
libtpu: 0.0.40
codegen_flags: <defaults>
</compile_context>

<pallas_src>
import jax
import jax.numpy as jnp
from jax.experimental import pallas as pl
from jax.experimental.pallas import tpu as pltpu


LOGICAL_DIMS = (223, 140, 70, 1)   # dims from the PyTorch module
PADDED_DIMS = (223, 256, 128, 1)   # hidden dims padded to lane multiples


def _round_up(n, m):
    return ((n + m - 1) // m) * m


def _mlp_kernel(x_ref, w1_ref, b1_ref, w2_ref, b2_ref, w3_ref, b3_ref, o_ref):
    # Cast to bf16 in-kernel (VPU work hidden under the MXU) instead of an
    # extra, un-hidden HBM pass in the wrapper.
    x = x_ref[...].astype(jnp.bfloat16)                               # (tb, 223)

    # Layer 0: Linear + ReLU (f32 accumulate, bf16 feed for the next MXU op).
    h1 = jnp.dot(x, w1_ref[...], preferred_element_type=jnp.float32) + b1_ref[...]
    h1 = jnp.maximum(h1, 0.0).astype(jnp.bfloat16)                    # (tb, 256)

    # Layer 1: Linear + ReLU (stays f32: next layer is off the MXU).
    h2 = jnp.dot(h1, w2_ref[...], preferred_element_type=jnp.float32) + b2_ref[...]
    h2 = jnp.maximum(h2, 0.0)                                         # (tb, 128) f32

    # Layer 2 (N=1): VPU multiply + XLU lane reduction instead of a 128-wide
    # MXU pass for one useful output lane.
    logits = jnp.sum(h2 * w3_ref[...], axis=-1, keepdims=True) + b3_ref[...]

    # sigmoid(x) = 0.5 * tanh(0.5 * x) + 0.5 : single EUP op, overflow-safe.
    o_ref[...] = 0.5 * jnp.tanh(0.5 * logits) + 0.5


def neural_net_forward(x, params, *, block_b=4096):
    """3-layer MLP forward, fully fused in one Pallas kernel, batch-tiled.

    x: [B, 223] float32 or bfloat16 (fed to the kernel as-is, no wrapper pass).
    """
    w1, b1, w2, b2, w3_row, b3 = params
    B, d_in = x.shape

    # Batch tile: multiple of 8 sublanes, capped by block_b; ragged tail is
    # handled by Pallas' OOB masking on the last block (cdiv grid, no padding).
    tb = _round_up(min(block_b, _round_up(B, 8)), 8)
    n_tiles = pl.cdiv(B, tb)

    # Weights/biases: full-array blocks with a constant index_map -> fetched
    # once, VMEM-resident for the whole grid.
    resident = lambda a: pl.BlockSpec(a.shape, lambda i: (0, 0))

    return pl.pallas_call(
        _mlp_kernel,
        out_shape=jax.ShapeDtypeStruct((B, 1), jnp.float32),
        grid=(n_tiles,),
        in_specs=[
            pl.BlockSpec((tb, d_in), lambda i: (i, 0)),   # x: pipelined per tile
            resident(w1), resident(b1),
            resident(w2), resident(b2),
            resident(w3_row), resident(b3),
        ],
        out_specs=pl.BlockSpec((tb, 1), lambda i: (i, 0)),
        compiler_params=pltpu.CompilerParams(
            dimension_semantics=("parallel",),
            # 4096-row tile: ~7.3 MiB double-buffered f32 x + ~9 MiB f32/bf16
            # intermediates -> exceeds v5e's 16 MiB scoped default; 40 MiB is
            # comfortable on v5e/v6e (128 MiB) and under v7x's 64 MiB/TC.
            vmem_limit_bytes=40 << 20,
        ),
    )(x, w1, b1, w2, b2, w3_row, b3)


def init_params(key, logical_dims=LOGICAL_DIMS, padded_dims=PADDED_DIMS):
    """torch.nn.Linear-style uniform init, zero-padded to lane-friendly dims.

    W1/W2 are bf16 [D_in, D_out] (MXU feed); W3 is stored as an f32 (1, 128)
    row (fed to the VPU/XLU, not the MXU); biases are f32 (1, D_out).
    """
    ws, bs = [], []
    for i in range(len(logical_dims) - 1):
        d_in, d_out = logical_dims[i], logical_dims[i + 1]
        p_in, p_out = padded_dims[i], padded_dims[i + 1]
        key, kw, kb = jax.random.split(key, 3)
        bound = 1.0 / (d_in ** 0.5)
        w = jax.random.uniform(kw, (d_in, d_out), jnp.float32, -bound, bound)
        b = jax.random.uniform(kb, (1, d_out), jnp.float32, -bound, bound)
        w_p = jnp.zeros((p_in, p_out), jnp.float32).at[:d_in, :d_out].set(w)
        b_p = jnp.zeros((1, p_out), jnp.float32).at[:, :d_out].set(b)
        ws.append(w_p)
        bs.append(b_p)
    w1 = ws[0].astype(jnp.bfloat16)            # (223, 256) bf16
    w2 = ws[1].astype(jnp.bfloat16)            # (256, 128) bf16
    w3_row = ws[2].T                           # (1, 128)   f32 (VPU path)
    return (w1, bs[0], w2, bs[1], w3_row, bs[2])


def reference_forward(x, params):
    """Plain-JAX reference (same bf16 feeds / f32 accumulation as the kernel)."""
    w1, b1, w2, b2, w3_row, b3 = params
    h = x.astype(jnp.bfloat16)
    h1 = jnp.maximum(jnp.dot(h, w1, preferred_element_type=jnp.float32) + b1, 0.0)
    h2 = jnp.maximum(
        jnp.dot(h1.astype(jnp.bfloat16), w2, preferred_element_type=jnp.float32) + b2,
        0.0)
    logits = jnp.sum(h2 * w3_row, axis=-1, keepdims=True) + b3
    return jax.nn.sigmoid(logits)


if __name__ == "__main__":
    key = jax.random.PRNGKey(0)
    params = init_params(key)

    # Small demo batch (single tile).
    key, kx = jax.random.split(key)
    x_small = jax.random.normal(kx, (8, LOGICAL_DIMS[0]), jnp.float32)
    out_small = jax.block_until_ready(neural_net_forward(x_small, params))
    ref_small = reference_forward(x_small, params)
    assert out_small.shape == (8, 1)
    assert jnp.allclose(out_small, ref_small, atol=5e-3, rtol=5e-3)

    # Ragged multi-tile batch: exercises the cdiv grid + masked final tile
    # (300 rows, 128-row tiles -> 3 grid steps, last one partially OOB).
    key, kx2 = jax.random.split(key)
    x_big = jax.random.normal(kx2, (300, LOGICAL_DIMS[0]), jnp.float32)
    out_big = jax.block_until_ready(neural_net_forward(x_big, params, block_b=128))
    ref_big = reference_forward(x_big, params)
    assert out_big.shape == (300, 1)
    assert jnp.allclose(out_big, ref_big, atol=5e-3, rtol=5e-3)

    print("KERNEL_OK")
</pallas_src>

<mosaic_0001>
module attributes {stable_mosaic.version = 11 : i64} {
  func.func @_mlp_kernel(%arg0: i32, %arg1: memref<8x223xf32, #tpu.memory_space<vmem>>, %arg2: memref<223x256xbf16, #tpu.memory_space<vmem>>, %arg3: memref<1x256xf32, #tpu.memory_space<vmem>>, %arg4: memref<256x128xbf16, #tpu.memory_space<vmem>>, %arg5: memref<1x128xf32, #tpu.memory_space<vmem>>, %arg6: memref<1x128xf32, #tpu.memory_space<vmem>>, %arg7: memref<1x1xf32, #tpu.memory_space<vmem>>, %arg8: memref<8x1xf32, #tpu.memory_space<vmem>>) attributes {dimension_semantics = [#tpu.dimension_semantics<parallel>], iteration_bounds = array<i64: 1>, scalar_prefetch = 0 : i64, scratch_operands = 0 : i64, tpu.core_type = #tpu.core_type<tc>, window_params = [{transform_indices = @transform_0, window_bounds = array<i64: 8, 223>}, {pipeline_mode = #tpu.pipeline_mode<synchronous>, transform_indices = @transform_1, window_bounds = array<i64: 223, 256>}, {pipeline_mode = #tpu.pipeline_mode<synchronous>, transform_indices = @transform_2, window_bounds = array<i64: 1, 256>}, {pipeline_mode = #tpu.pipeline_mode<synchronous>, transform_indices = @transform_3, window_bounds = array<i64: 256, 128>}, {pipeline_mode = #tpu.pipeline_mode<synchronous>, transform_indices = @transform_4, window_bounds = array<i64: 1, 128>}, {pipeline_mode = #tpu.pipeline_mode<synchronous>, transform_indices = @transform_5, window_bounds = array<i64: 1, 128>}, {pipeline_mode = #tpu.pipeline_mode<synchronous>, transform_indices = @transform_6, window_bounds = array<i64: 1, 1>}, {transform_indices = @transform_7, window_bounds = array<i64: 8, 1>}]} {
    %c0 = arith.constant 0 : index
    %c0_0 = arith.constant 0 : index
    %0 = vector.load %arg1[%c0, %c0_0] : memref<8x223xf32, #tpu.memory_space<vmem>>, vector<8x223xf32>
    %1 = arith.truncf %0 : vector<8x223xf32> to vector<8x223xbf16>
    %c0_1 = arith.constant 0 : index
    %c0_2 = arith.constant 0 : index
    %2 = vector.load %arg2[%c0_1, %c0_2] : memref<223x256xbf16, #tpu.memory_space<vmem>>, vector<223x256xbf16>
    %cst = arith.constant dense<0.000000e+00> : vector<8x256xf32>
    %3 = tpu.matmul %1, %2, %cst {dimension_numbers = #tpu.dot_dimension_numbers<[1], [0], [0], [1], [0, 0, 1, 1], [], []>} : vector<8x223xbf16>, vector<223x256xbf16>, vector<8x256xf32> -> vector<8x256xf32>
    %c0_3 = arith.constant 0 : index
    %c0_4 = arith.constant 0 : index
    %4 = vector.load %arg3[%c0_3, %c0_4] : memref<1x256xf32, #tpu.memory_space<vmem>>, vector<1x256xf32>
    %5 = vector.broadcast %4 : vector<1x256xf32> to vector<8x256xf32>
    %6 = arith.addf %3, %5 : vector<8x256xf32>
    %cst_5 = arith.constant 0.000000e+00 : f32
    %7 = vector.broadcast %cst_5 : f32 to vector<8x256xf32>
    %8 = arith.maximumf %6, %7 : vector<8x256xf32>
    %9 = arith.truncf %8 : vector<8x256xf32> to vector<8x256xbf16>
    %c0_6 = arith.constant 0 : index
    %c0_7 = arith.constant 0 : index
    %10 = vector.load %arg4[%c0_6, %c0_7] : memref<256x128xbf16, #tpu.memory_space<vmem>>, vector<256x128xbf16>
    %cst_8 = arith.constant dense<0.000000e+00> : vector<8x128xf32>
    %11 = tpu.matmul %9, %10, %cst_8 {dimension_numbers = #tpu.dot_dimension_numbers<[1], [0], [0], [1], [0, 0, 1, 1], [], []>} : vector<8x256xbf16>, vector<256x128xbf16>, vector<8x128xf32> -> vector<8x128xf32>
    %c0_9 = arith.constant 0 : index
    %c0_10 = arith.constant 0 : index
    %12 = vector.load %arg5[%c0_9, %c0_10] : memref<1x128xf32, #tpu.memory_space<vmem>>, vector<1x128xf32>
    %13 = vector.broadcast %12 : vector<1x128xf32> to vector<8x128xf32>
    %14 = arith.addf %11, %13 : vector<8x128xf32>
    %cst_11 = arith.constant 0.000000e+00 : f32
    %15 = vector.broadcast %cst_11 : f32 to vector<8x128xf32>
    %16 = arith.maximumf %14, %15 : vector<8x128xf32>
    %c0_12 = arith.constant 0 : index
    %c0_13 = arith.constant 0 : index
    %17 = vector.load %arg6[%c0_12, %c0_13] : memref<1x128xf32, #tpu.memory_space<vmem>>, vector<1x128xf32>
    %18 = vector.broadcast %17 : vector<1x128xf32> to vector<8x128xf32>
    %19 = arith.mulf %16, %18 : vector<8x128xf32>
    %cst_14 = arith.constant dense<0.000000e+00> : vector<8xf32>
    %20 = vector.multi_reduction <add>, %19, %cst_14 [1] : vector<8x128xf32> to vector<8xf32>
    %21 = vector.shape_cast %20 : vector<8xf32> to vector<8x1xf32>
    %c0_15 = arith.constant 0 : index
    %c0_16 = arith.constant 0 : index
    %22 = vector.load %arg7[%c0_15, %c0_16] : memref<1x1xf32, #tpu.memory_space<vmem>>, vector<1x1xf32>
    %23 = vector.broadcast %22 : vector<1x1xf32> to vector<8x1xf32>
    %24 = arith.addf %21, %23 : vector<8x1xf32>
    %cst_17 = arith.constant 5.000000e-01 : f32
    %25 = vector.broadcast %cst_17 : f32 to vector<8x1xf32>
    %26 = arith.mulf %25, %24 : vector<8x1xf32>
    %27 = math.tanh %26 : vector<8x1xf32>
    %cst_18 = arith.constant 5.000000e-01 : f32
    %28 = vector.broadcast %cst_18 : f32 to vector<8x1xf32>
    %29 = arith.mulf %28, %27 : vector<8x1xf32>
    %cst_19 = arith.constant 5.000000e-01 : f32
    %30 = vector.broadcast %cst_19 : f32 to vector<8x1xf32>
    %31 = arith.addf %29, %30 : vector<8x1xf32>
    %c0_20 = arith.constant 0 : index
    %c0_21 = arith.constant 0 : index
    %32 = vector.load %arg8[%c0_20, %c0_21] : memref<8x1xf32, #tpu.memory_space<vmem>>, vector<8x1xf32>
    tpu.vector_store %arg8[%c0_20, %c0_21], %31 {strides = array<i32>} : memref<8x1xf32, #tpu.memory_space<vmem>>, vector<8x1xf32>,
    return
  }
  func.func @transform_0(%arg0: i32) -> (i32, i32) {
    %c0_i32 = arith.constant 0 : i32
    %c0_i32_0 = arith.constant 0 : i32
    return %arg0, %c0_i32 : i32, i32
  }
  func.func @transform_1(%arg0: i32) -> (i32, i32) {
    %c0_i32 = arith.constant 0 : i32
    %c0_i32_0 = arith.constant 0 : i32
    %c0_i32_1 = arith.constant 0 : i32
    return %c0_i32, %c0_i32_0 : i32, i32
  }
  func.func @transform_2(%arg0: i32) -> (i32, i32) {
    %c0_i32 = arith.constant 0 : i32
    %c0_i32_0 = arith.constant 0 : i32
    %c0_i32_1 = arith.constant 0 : i32
    return %c0_i32, %c0_i32_0 : i32, i32
  }
  func.func @transform_3(%arg0: i32) -> (i32, i32) {
    %c0_i32 = arith.constant 0 : i32
    %c0_i32_0 = arith.constant 0 : i32
    %c0_i32_1 = arith.constant 0 : i32
    return %c0_i32, %c0_i32_0 : i32, i32
  }
  func.func @transform_4(%arg0: i32) -> (i32, i32) {
    %c0_i32 = arith.constant 0 : i32
    %c0_i32_0 = arith.constant 0 : i32
    %c0_i32_1 = arith.constant 0 : i32
    return %c0_i32, %c0_i32_0 : i32, i32
  }
  func.func @transform_5(%arg0: i32) -> (i32, i32) {
    %c0_i32 = arith.constant 0 : i32
    %c0_i32_0 = arith.constant 0 : i32
    %c0_i32_1 = arith.constant 0 : i32
    return %c0_i32, %c0_i32_0 : i32, i32
  }
  func.func @transform_6(%arg0: i32) -> (i32, i32) {
    %c0_i32 = arith.constant 0 : i32
    %c0_i32_0 = arith.constant 0 : i32
    %c0_i32_1 = arith.constant 0 : i32
    return %c0_i32, %c0_i32_0 : i32, i32
  }
  func.func @transform_7(%arg0: i32) -> (i32, i32) {
    %c0_i32 = arith.constant 0 : i32
    %c0_i32_0 = arith.constant 0 : i32
    return %arg0, %c0_i32 : i32, i32
  }
}

</mosaic_0001>

<llo_original>
// kernel: tpu_custom_call.1
$region0: #{tpu_custom_call.1}
  #allocation0 [shape = 'u32[]', space=smem, size = 0x4, offset = 0x4, fixed_abs, tag = 'smem constant byte address 0x4 - core index']
  #allocation1 [shape = 'u32[144,128]{1,0:T(1,128)}', space=vmem, size = 0x12000, scoped, tag = 'internal scratch']
  #allocation2 [shape = 'f32[1,1]{1,0:T(1,128)S(1)}', space=vmem, size = 0x200, scoped, tag = 'scoped memory for tpu_custom_call.1']
  %s0 = inlined_call_operand.hbm [shape: f32[8,223], index: 0, kind: input, shape index: {}]
  %s1 = inlined_call_operand.hbm [shape: bf16[223,256], index: 1, kind: input, shape index: {}]
  %s2 = inlined_call_operand.vmem [shape: f32[1,256], index: 2, kind: input, shape index: {}]
  %s3 = inlined_call_operand.hbm [shape: bf16[256,128], index: 3, kind: input, shape index: {}]
  %s4 = inlined_call_operand.vmem [shape: f32[1,128], index: 4, kind: input, shape index: {}]
  %s5 = inlined_call_operand.vmem [shape: f32[1,128], index: 5, kind: input, shape index: {}]
  %s6 = inlined_call_operand.<no memory space> [shape: f32[1,1], index: 6, kind: input, shape index: {}]
  %s7 = inlined_call_operand.vmem [shape: f32[8,1], index: 7, kind: output, shape index: {}]
  %s8 = sld [smem:[#allocation0]]
  $region50: #{tpu_custom_call.1} parent=0
    _
  %s10 = ssub.s32 1, %s8
  %s11 = scalar_select 0, %s10, %s8
  %v12 = vstv %s6
  %13 = vst [vmem:[#allocation2] sm:$0x1] %v12
  $region1: #{tpu_custom_call.1} parent=0
    #allocation3 [shape = 'u8[8192]{0}', space=vmem, size = 0x2000, scoped, tag = 'input window, operand 0, single buffered']
    #allocation4 [shape = 's32[1]{0}', space=sflag, size = 0x4, scoped, tag = 'scoped memory for tpu_custom_call.1']
    #allocation5 [shape = 'u8[114688]{0}', space=vmem, size = 0x1c000, scoped, tag = 'input window, operand 1, single buffered']
    #allocation6 [shape = 's32[1]{0}', space=sflag, size = 0x4, scoped, tag = 'scoped memory for tpu_custom_call.1']
    #allocation7 [shape = 'u8[65536]{0}', space=vmem, size = 0x10000, scoped, tag = 'input window, operand 3, single buffered']
    %14 = vsyncpa [#allocation4], 0
    %15 = vsyncpa [#allocation6], 0
    // Predicated region
    $region2: #{tpu_custom_call.1} parent=1 // pred_check
      _
    $region3: #{tpu_custom_call.1} parent=1 // pred_check_branch
      %17 = sbr.rel (0) target = $region5
    $region4: #{tpu_custom_call.1} parent=1 // pred_region
      %s19 = ssub.s32 256, 256
      %20 = vsyncadd [#allocation4], %s19
      %s22 = sshll.u32 [#allocation3], 4
      %s23 = int_to_ptr.vmem [resolvable:$true] %s22
      %25 = dma.hbm_to_vmem [thread:$0]  %s0, 256, %s23, [#allocation4]
    $region5: #{tpu_custom_call.1} parent=1 // pred_fallthru
      _
    // Predicated region
    $region6: #{tpu_custom_call.1} parent=1 // pred_check
      _
    $region7: #{tpu_custom_call.1} parent=1 // pred_check_branch
      %27 = sbr.rel (0) target = $region9
    $region8: #{tpu_custom_call.1} parent=1 // pred_region
      %s29 = ssub.s32 3584, 3584
      %30 = vsyncadd [#allocation6], %s29
      %s31 = sshll.u32 [#allocation5], 4
      %s32 = int_to_ptr.vmem [resolvable:$true] %s31
      %37 = dma.hbm_to_vmem [thread:$0]  %s1, 3584, %s32, [#allocation6], 128, 128, 8
    $region9: #{tpu_custom_call.1} parent=1 // pred_fallthru
      _
    // Predicated region
    $region10: #{tpu_custom_call.1} parent=1 // pred_check
      _
    $region11: #{tpu_custom_call.1} parent=1 // pred_check_branch
      %39 = sbr.rel (0) target = $region13
    $region12: #{tpu_custom_call.1} parent=1 // pred_region
      _
    $region13: #{tpu_custom_call.1} parent=1 // pred_fallthru
      _
    // Predicated region
    $region14: #{tpu_custom_call.1} parent=1 // pred_check
      _
    $region15: #{tpu_custom_call.1} parent=1 // pred_check_branch
      %41 = sbr.rel (0) target = $region17
    $region16: #{tpu_custom_call.1} parent=1 // pred_region
      %s43 = ssub.s32 2048, 2048
      %44 = vsyncadd [#allocation6], %s43
      %s45 = sshll.u32 [#allocation7], 4
      %s46 = int_to_ptr.vmem [resolvable:$true] %s45
      %51 = dma.hbm_to_vmem [thread:$0]  %s3, 2048, %s46, [#allocation6], 64, 64, 4
    $region17: #{tpu_custom_call.1} parent=1 // pred_fallthru
      _
    // Predicated region
    $region18: #{tpu_custom_call.1} parent=1 // pred_check
      _
    $region19: #{tpu_custom_call.1} parent=1 // pred_check_branch
      %53 = sbr.rel (0) target = $region21
    $region20: #{tpu_custom_call.1} parent=1 // pred_region
      _
    $region21: #{tpu_custom_call.1} parent=1 // pred_fallthru
      _
    // Predicated region
    $region22: #{tpu_custom_call.1} parent=1 // pred_check
      _
    $region23: #{tpu_custom_call.1} parent=1 // pred_check_branch
      %55 = sbr.rel (0) target = $region25
    $region24: #{tpu_custom_call.1} parent=1 // pred_region
      _
    $region25: #{tpu_custom_call.1} parent=1 // pred_fallthru
      _
    // Predicated region
    $region26: #{tpu_custom_call.1} parent=1 // pred_check
      _
    $region27: #{tpu_custom_call.1} parent=1 // pred_check_branch
      %57 = sbr.rel (0) target = $region29
    $region28: #{tpu_custom_call.1} parent=1 // pred_region
      _
    $region29: #{tpu_custom_call.1} parent=1 // pred_fallthru
      _
    // Predicated region
    $region30: #{tpu_custom_call.1} parent=1 // pred_check
      _
    $region31: #{tpu_custom_call.1} parent=1 // pred_check_branch
      %59 = sbr.rel (0) target = $region33
    $region32: #{tpu_custom_call.1} parent=1 // pred_region
      %60 = dma.done [#allocation4], 256
    $region33: #{tpu_custom_call.1} parent=1 // pred_fallthru
      _
    // Predicated region
    $region34: #{tpu_custom_call.1} parent=1 // pred_check
      _
    $region35: #{tpu_custom_call.1} parent=1 // pred_check_branch
      %62 = sbr.rel (0) target = $region37
    $region36: #{tpu_custom_call.1} parent=1 // pred_region
      %63 = dma.done [#allocation6], 3584
    $region37: #{tpu_custom_call.1} parent=1 // pred_fallthru
      _
    // Predicated region
    $region38: #{tpu_custom_call.1} parent=1 // pred_check
      _
    $region39: #{tpu_custom_call.1} parent=1 // pred_check_branch
      %65 = sbr.rel (0) target = $region41
    $region40: #{tpu_custom_call.1} parent=1 // pred_region
      %66 = dma.done [#allocation6], 2048
    $region41: #{tpu_custom_call.1} parent=1 // pred_fallthru
      _
    %v68 = vld [vmem:[#allocation3] sm:$0xff]
    %v69 = vld [vmem:[#allocation3 + $0x8] sm:$0xff]
    %v70 = vpack.c.bf16 %v68, %v68
    %v71 = vpack.c.bf16 %v69, %v69
    %v72 = vld [vmem:[#allocation5] sm:$0xff]
    %v73 = vld [vmem:[#allocation5 + $0x8] sm:$0xff]
    %v74 = vld [vmem:[#allocation5 + $0x10] sm:$0xff]
    %v75 = vld [vmem:[#allocation5 + $0x18] sm:$0xff]
    %v76 = vld [vmem:[#allocation5 + $0x20] sm:$0xff]
    %v77 = vld [vmem:[#allocation5 + $0x28] sm:$0xff]
    %v78 = vld [vmem:[#allocation5 + $0x30] sm:$0xff]
    %v79 = vld [vmem:[#allocation5 + $0x38] sm:$0xff]
    %v80 = vld [vmem:[#allocation5 + $0x40] sm:$0xff]
    %v81 = vld [vmem:[#allocation5 + $0x48] sm:$0xff]
    %v82 = vld [vmem:[#allocation5 + $0x50] sm:$0xff]
    %v83 = vld [vmem:[#allocation5 + $0x58] sm:$0xff]
    %v84 = vld [vmem:[#allocation5 + $0x60] sm:$0xff]
    %v85 = vld [vmem:[#allocation5 + $0x68] sm:$0xff]
    %v86 = vld [vmem:[#allocation5 + $0x70] sm:$0xff]
    %v87 = vld [vmem:[#allocation5 + $0x78] sm:$0xff]
    %v88 = vld [vmem:[#allocation5 + $0x80] sm:$0xff]
    %v89 = vld [vmem:[#allocation5 + $0x88] sm:$0xff]
    %v90 = vld [vmem:[#allocation5 + $0x90] sm:$0xff]
    %v91 = vld [vmem:[#allocation5 + $0x98] sm:$0xff]
    %v92 = vld [vmem:[#allocation5 + $0xa0] sm:$0xff]
    %v93 = vld [vmem:[#allocation5 + $0xa8] sm:$0xff]
    %v94 = vld [vmem:[#allocation5 + $0xb0] sm:$0xff]
    %v95 = vld [vmem:[#allocation5 + $0xb8] sm:$0xff]
    %v96 = vld [vmem:[#allocation5 + $0xc0] sm:$0xff]
    %v97 = vld [vmem:[#allocation5 + $0xc8] sm:$0xff]
    %v98 = vld [vmem:[#allocation5 + $0xd0] sm:$0xff]
    %v99 = vld [vmem:[#allocation5 + $0xd8] sm:$0xff]
    %v100 = vld [vmem:[%s2] sm:$0x3]
    %v102 = vlaneseq
    %v103 = vshrl.u32 %v102, 7
    %v104 = vsub.s32 0, %v103
    %v105 = vrot.slane %v100, %v104
    %v106 = vlaneseq
    %v107 = vshrl.u32 %v106, 7
    %v108 = vsub.s32 1, %v107
    %v109 = vrot.slane %v100, %v108
    %v140 = vunpack.c.l.b16 %v72
    %v141 = vunpack.c.h.b16 %v72
    %v142 = vunpack.c.l.b16 %v73
    %v143 = vunpack.c.h.b16 %v73
    %v144 = vunpack.c.l.b16 %v74
    %v145 = vunpack.c.h.b16 %v74
    %v146 = vunpack.c.l.b16 %v75
    %v147 = vunpack.c.h.b16 %v75
    %v148 = vunpack.c.l.b16 %v76
    %v149 = vunpack.c.h.b16 %v76
    %v150 = vunpack.c.l.b16 %v77
    %v151 = vunpack.c.h.b16 %v77
    %v152 = vunpack.c.l.b16 %v78
    %v153 = vunpack.c.h.b16 %v78
    %v154 = vunpack.c.l.b16 %v79
    %v155 = vunpack.c.h.b16 %v79
    %v156 = vunpack.c.l.b16 %v80
    %v157 = vunpack.c.h.b16 %v80
    %v158 = vunpack.c.l.b16 %v81
    %v159 = vunpack.c.h.b16 %v81
    %v160 = vunpack.c.l.b16 %v82
    %v161 = vunpack.c.h.b16 %v82
    %v162 = vunpack.c.l.b16 %v83
    %v163 = vunpack.c.h.b16 %v83
    %v164 = vunpack.c.l.b16 %v84
    %v165 = vunpack.c.h.b16 %v84
    %v166 = vunpack.c.l.b16 %v85
    %v167 = vunpack.c.h.b16 %v85
    %v168 = vunpack.c.l.b16 %v86
    %v169 = vunpack.c.h.b16 %v86
    %v170 = vunpack.c.l.b16 %v87
    %v171 = vunpack.c.h.b16 %v87
    %v172 = vunpack.c.l.b16 %v88
    %v173 = vunpack.c.h.b16 %v88
    %v174 = vunpack.c.l.b16 %v89
    %v175 = vunpack.c.h.b16 %v89
    %v176 = vunpack.c.l.b16 %v90
    %v177 = vunpack.c.h.b16 %v90
    %v178 = vunpack.c.l.b16 %v91
    %v179 = vunpack.c.h.b16 %v91
    %v180 = vunpack.c.l.b16 %v92
    %v181 = vunpack.c.h.b16 %v92
    %v182 = vunpack.c.l.b16 %v93
    %v183 = vunpack.c.h.b16 %v93
    %v184 = vunpack.c.l.b16 %v94
    %v185 = vunpack.c.h.b16 %v94
    %v186 = vunpack.c.l.b16 %v95
    %v187 = vunpack.c.h.b16 %v95
    %v188 = vunpack.c.l.b16 %v96
    %v189 = vunpack.c.h.b16 %v96
    %v190 = vunpack.c.l.b16 %v97
    %v191 = vunpack.c.h.b16 %v97
    %v192 = vunpack.c.l.b16 %v98
    %v193 = vunpack.c.h.b16 %v98
    %v194 = vunpack.c.l.b16 %v99
    %v195 = vunpack.c.h.b16 %v99
    %v196 = vpack.c.b16 %v142, %v140
    %v197 = vpack.c.b16 %v143, %v141
    %v198 = vpack.c.b16 %v146, %v144
    %v199 = vpack.c.b16 %v147, %v145
    %v200 = vpack.c.b16 %v150, %v148
    %v201 = vpack.c.b16 %v151, %v149
    %v202 = vpack.c.b16 %v154, %v152
    %v203 = vpack.c.b16 %v155, %v153
    %v204 = vpack.c.b16 %v158, %v156
    %v205 = vpack.c.b16 %v159, %v157
    %v206 = vpack.c.b16 %v162, %v160
    %v207 = vpack.c.b16 %v163, %v161
    %v208 = vpack.c.b16 %v166, %v164
    %v209 = vpack.c.b16 %v167, %v165
    %v210 = vpack.c.b16 %v170, %v168
    %v211 = vpack.c.b16 %v171, %v169
    %v212 = vpack.c.b16 %v174, %v172
    %v213 = vpack.c.b16 %v175, %v173
    %v214 = vpack.c.b16 %v178, %v176
    %v215 = vpack.c.b16 %v179, %v177
    %v216 = vpack.c.b16 %v182, %v180
    %v217 = vpack.c.b16 %v183, %v181
    %v218 = vpack.c.b16 %v186, %v184
    %v219 = vpack.c.b16 %v187, %v185
    %v220 = vpack.c.b16 %v190, %v188
    %v221 = vpack.c.b16 %v191, %v189
    %v222 = vpack.c.b16 %v194, %v192
    %v223 = vpack.c.b16 %v195, %v193
    %vm250 = vcmask 777216
    %v252 = vsel %vm250, %v71, 0
    %vm254 = vcmask 1046528
    %vm255 = vcmask 1047552
    %v256 = vsel %vm254, 4294967295, 65535
    %v257 = vsel %vm255, %v256, 0
    %v259 = vand.u32 %v222, %v257
    %v262 = vand.u32 %v223, %v257
    %264 = vmatprep.subr.bf16.mxu0 %v197
    %265 = vmatpush1.bf16.msra.mxu0 %v196
    %266 = vmatprep.subr.bf16.mxu0 %v199
    %267 = vmatpush1.bf16.msra.mxu0 %v198
    %268 = vmatprep.subr.bf16.mxu0 %v201
    %269 = vmatpush1.bf16.msra.mxu0 %v200
    %270 = vmatprep.subr.bf16.mxu0 %v203
    %271 = vmatpush1.bf16.msra.mxu0 %v202
    %272 = vmatprep.subr.bf16.mxu0 %v205
    %273 = vmatpush1.bf16.msra.mxu0 %v204
    %274 = vmatprep.subr.bf16.mxu0 %v207
    %275 = vmatpush1.bf16.msra.mxu0 %v206
    %276 = vmatprep.subr.bf16.mxu0 %v209
    %277 = vmatpush1.bf16.msra.mxu0 %v208
    %278 = vmatprep.subr.bf16.mxu0 %v211
    %279 = vmatpush1.bf16.msra.mxu0 %v210
    %280 = vmatprep.subr.bf16.mxu0 %v213
    %281 = vmatpush1.bf16.msra.mxu0 %v212
    %282 = vmatprep.subr.bf16.mxu0 %v215
    %283 = vmatpush1.bf16.msra.mxu0 %v214
    %284 = vmatprep.subr.bf16.mxu0 %v217
    %285 = vmatpush1.bf16.msra.mxu0 %v216
    %286 = vmatprep.subr.bf16.mxu0 %v219
    %287 = vmatpush1.bf16.msra.mxu0 %v218
    %288 = vmatprep.subr.bf16.mxu0 %v221
    %289 = vmatpush1.bf16.msra.mxu0 %v220
    %290 = vmatprep.subr.bf16.mxu0 %v262
    %291 = vmatpush1.bf16.msra.mxu0 %v259
    %292 = vmatprep.subr.bf16.mxu0 0
    %293 = vmatpush1.bf16.msra.mxu0 0
    %294 = vmatprep.subr.bf16.mxu0 0
    %295 = vmatpush1.bf16.msra.mxu0 0
    %296 = vmatprep.mubr.bf16.mxu0 %v252
    %297 = vmatmul.mubr.bf16.gmra.mrb[0].mxu0 %v70
    %v298 = vpop.f32.mrb[0].mxu0
    %v299 = vadd.f32 %v105, %v298
    %v300 = vpop.f32.mrb[0].mxu0
    %v301 = vadd.f32 %v109, %v300
    %v302 = vpop.f32.mrb[0].mxu0
    %v303 = vpop.f32.mrb[0].mxu0
    %304 = vdwg.mxu0
    %v305 = vmax.f32 %v299, 0.0
    %v306 = vmax.f32 %v301, 0.0
    %v307 = vpack.c.bf16 %v305, %v305
    %v308 = vpack.c.bf16 %v306, %v306
    %v309 = vld [vmem:[#allocation7] sm:$0xf]
    %v310 = vld [vmem:[#allocation7 + $0x4] sm:$0xf]
    %v311 = vld [vmem:[#allocation7 + $0x8] sm:$0xf]
    %v312 = vld [vmem:[#allocation7 + $0xc] sm:$0xf]
    %v313 = vld [vmem:[#allocation7 + $0x10] sm:$0xf]
    %v314 = vld [vmem:[#allocation7 + $0x14] sm:$0xf]
    %v315 = vld [vmem:[#allocation7 + $0x18] sm:$0xf]
    %v316 = vld [vmem:[#allocation7 + $0x1c] sm:$0xf]
    %v317 = vld [vmem:[#allocation7 + $0x20] sm:$0xf]
    %v318 = vld [vmem:[#allocation7 + $0x24] sm:$0xf]
    %v319 = vld [vmem:[#allocation7 + $0x28] sm:$0xf]
    %v320 = vld [vmem:[#allocation7 + $0x2c] sm:$0xf]
    %v321 = vld [vmem:[#allocation7 + $0x30] sm:$0xf]
    %v322 = vld [vmem:[#allocation7 + $0x34] sm:$0xf]
    %v323 = vld [vmem:[#allocation7 + $0x38] sm:$0xf]
    %v324 = vld [vmem:[#allocation7 + $0x3c] sm:$0xf]
    %v325 = vld [vmem:[#allocation7 + $0x40] sm:$0xf]
    %v326 = vld [vmem:[#allocation7 + $0x44] sm:$0xf]
    %v327 = vld [vmem:[#allocation7 + $0x48] sm:$0xf]
    %v328 = vld [vmem:[#allocation7 + $0x4c] sm:$0xf]
    %v329 = vld [vmem:[#allocation7 + $0x50] sm:$0xf]
    %v330 = vld [vmem:[#allocation7 + $0x54] sm:$0xf]
    %v331 = vld [vmem:[#allocation7 + $0x58] sm:$0xf]
    %v332 = vld [vmem:[#allocation7 + $0x5c] sm:$0xf]
    %v333 = vld [vmem:[#allocation7 + $0x60] sm:$0xf]
    %v334 = vld [vmem:[#allocation7 + $0x64] sm:$0xf]
    %v335 = vld [vmem:[#allocation7 + $0x68] sm:$0xf]
    %v336 = vld [vmem:[#allocation7 + $0x6c] sm:$0xf]
    %v337 = vld [vmem:[#allocation7 + $0x70] sm:$0xf]
    %v338 = vld [vmem:[#allocation7 + $0x74] sm:$0xf]
    %v339 = vld [vmem:[#allocation7 + $0x78] sm:$0xf]
    %v340 = vld [vmem:[#allocation7 + $0x7c] sm:$0xf]
    %v341 = vld [vmem:[%s4] sm:$0x1]
    %v343 = vlaneseq
    %v344 = vshrl.u32 %v343, 7
    %v345 = vsub.s32 0, %v344
    %v346 = vrot.slane %v341, %v345
    %v380 = vunpack.c.l.b16 %v309
    %v381 = vunpack.c.l.b16 %v310
    %v382 = vunpack.c.l.b16 %v311
    %v383 = vunpack.c.l.b16 %v312
    %v384 = vunpack.c.l.b16 %v313
    %v385 = vunpack.c.l.b16 %v314
    %v386 = vunpack.c.l.b16 %v315
    %v387 = vunpack.c.l.b16 %v316
    %v388 = vunpack.c.l.b16 %v317
    %v389 = vunpack.c.l.b16 %v318
    %v390 = vunpack.c.l.b16 %v319
    %v391 = vunpack.c.l.b16 %v320
    %v392 = vunpack.c.l.b16 %v321
    %v393 = vunpack.c.l.b16 %v322
    %v394 = vunpack.c.l.b16 %v323
    %v395 = vunpack.c.l.b16 %v324
    %v396 = vunpack.c.l.b16 %v325
    %v397 = vunpack.c.l.b16 %v326
    %v398 = vunpack.c.l.b16 %v327
    %v399 = vunpack.c.l.b16 %v328
    %v400 = vunpack.c.l.b16 %v329
    %v401 = vunpack.c.l.b16 %v330
    %v402 = vunpack.c.l.b16 %v331
    %v403 = vunpack.c.l.b16 %v332
    %v404 = vunpack.c.l.b16 %v333
    %v405 = vunpack.c.l.b16 %v334
    %v406 = vunpack.c.l.b16 %v335
    %v407 = vunpack.c.l.b16 %v336
    %v408 = vunpack.c.l.b16 %v337
    %v409 = vunpack.c.l.b16 %v338
    %v410 = vunpack.c.l.b16 %v339
    %v411 = vunpack.c.l.b16 %v340
    %v412 = vpack.c.b16 %v381, %v380
    %v413 = vpack.c.b16 %v383, %v382
    %v414 = vpack.c.b16 %v385, %v384
    %v415 = vpack.c.b16 %v387, %v386
    %v416 = vpack.c.b16 %v389, %v388
    %v417 = vpack.c.b16 %v391, %v390
    %v418 = vpack.c.b16 %v393, %v392
    %v419 = vpack.c.b16 %v395, %v394
    %v420 = vpack.c.b16 %v397, %v396
    %v421 = vpack.c.b16 %v399, %v398
    %v422 = vpack.c.b16 %v401, %v400
    %v423 = vpack.c.b16 %v403, %v402
    %v424 = vpack.c.b16 %v405, %v404
    %v425 = vpack.c.b16 %v407, %v406
    %v426 = vpack.c.b16 %v409, %v408
    %v427 = vpack.c.b16 %v411, %v410
    %444 = vmatprep.subr.bf16.mxu0 0
    %445 = vmatpush1.bf16.msra.mxu0 %v412
    %446 = vmatprep.subr.bf16.mxu0 0
    %447 = vmatpush1.bf16.msra.mxu0 %v413
    %448 = vmatprep.subr.bf16.mxu0 0
    %449 = vmatpush1.bf16.msra.mxu0 %v414
    %450 = vmatprep.subr.bf16.mxu0 0
    %451 = vmatpush1.bf16.msra.mxu0 %v415
    %452 = vmatprep.subr.bf16.mxu0 0
    %453 = vmatpush1.bf16.msra.mxu0 %v416
    %454 = vmatprep.subr.bf16.mxu0 0
    %455 = vmatpush1.bf16.msra.mxu0 %v417
    %456 = vmatprep.subr.bf16.mxu0 0
    %457 = vmatpush1.bf16.msra.mxu0 %v418
    %458 = vmatprep.subr.bf16.mxu0 0
    %459 = vmatpush1.bf16.msra.mxu0 %v419
    %460 = vmatprep.subr.bf16.mxu0 0
    %461 = vmatpush1.bf16.msra.mxu0 %v420
    %462 = vmatprep.subr.bf16.mxu0 0
    %463 = vmatpush1.bf16.msra.mxu0 %v421
    %464 = vmatprep.subr.bf16.mxu0 0
    %465 = vmatpush1.bf16.msra.mxu0 %v422
    %466 = vmatprep.subr.bf16.mxu0 0
    %467 = vmatpush1.bf16.msra.mxu0 %v423
    %468 = vmatprep.subr.bf16.mxu0 0
    %469 = vmatpush1.bf16.msra.mxu0 %v424
    %470 = vmatprep.subr.bf16.mxu0 0
    %471 = vmatpush1.bf16.msra.mxu0 %v425
    %472 = vmatprep.subr.bf16.mxu0 0
    %473 = vmatpush1.bf16.msra.mxu0 %v426
    %474 = vmatprep.subr.bf16.mxu0 0
    %475 = vmatpush1.bf16.msra.mxu0 %v427
    %476 = vmatprep.mubr.bf16.mxu0 %v308
    %477 = vmatmul.mubr.bf16.gmra.mrb[0].mxu0 %v307
    %v478 = vpop.f32.mrb[0].mxu0
    %v479 = vadd.f32 %v346, %v478
    %v480 = vpop.f32.mrb[0].mxu0
    %v481 = vpop.f32.mrb[0].mxu0
    %v482 = vpop.f32.mrb[0].mxu0
    %483 = vdwg.mxu0
    %v484 = vmax.f32 %v479, 0.0
    %v485 = vld [vmem:[%s5] sm:$0x1]
    %v487 = vlaneseq
    %v488 = vshrl.u32 %v487, 7
    %v489 = vsub.s32 0, %v488
    %v490 = vrot.slane %v485, %v489
    %v492 = vmul.f32 %v484, %v490
    %493 = vadd.xlane.f32.xlu0 %v492
    %v494 = vpop.xlane.xlu0 %493
    %v495 = vld [vmem:[#allocation2] sm:$0x1]
    %v497 = vlaneseq
    %v498 = vshrl.u32 %v497, 7
    %v499 = vsub.s32 0, %v498
    %v500 = vrot.slane %v495, %v499
    %v502 = vadd.f32 %v494, %v500
    %v503 = vmul.f32 %v502, 0.5
    %v504 = vtanh.pop %v503
    %v505 = vmul.f32 %v504, 0.5
    %v506 = vadd.f32 %v505, 0.5
    %vm507 = vcmask 7168
    %508 = vst.msk [vmem:[%s7] sm:$0xff] %vm507, %v506
    // Predicated region
    $region42: #{tpu_custom_call.1} parent=1 // pred_check
      _
    $region43: #{tpu_custom_call.1} parent=1 // pred_check_branch
      %510 = sbr.rel (0) target = $region45
    $region44: #{tpu_custom_call.1} parent=1 // pred_region
      _
    $region45: #{tpu_custom_call.1} parent=1 // pred_fallthru
      _
    // Predicated region
    $region46: #{tpu_custom_call.1} parent=1 // pred_check
      _
    $region47: #{tpu_custom_call.1} parent=1 // pred_check_branch
      %512 = sbr.rel (0) target = $region49
    $region48: #{tpu_custom_call.1} parent=1 // pred_region
      _
    $region49: #{tpu_custom_call.1} parent=1 // pred_fallthru
      _
    %513 = vsyncpa [#allocation4], 1
    %514 = vsyncpa [#allocation6], 1

</llo_original>
